<compile_context>
chip_gen: v7x
topology: tpu7x:2x2x1
jax: 0.10.0
libtpu: 0.0.40
codegen_flags: <defaults>
</compile_context>

<pallas_src>
import math

import jax
import jax.numpy as jnp
from jax.experimental import pallas as pl
from jax.experimental.pallas import tpu as pltpu

EPS = 1e-5


def mlp_kernel(xt_ref,
               w1_ref, g1_ref, beta1_ref,
               w2_ref, g2_ref, beta2_ref,
               w3_ref, g3_ref, beta3_ref,
               w4_ref, b4_ref,
               o_ref):
    """Whole forward pass in one invocation; everything fits easily in VMEM.

    xt_ref: (input_size, B)  -- batch on the lane axis.
    o_ref : (1, B)           -- lane-dense output slab.
    """
    inv_b = 1.0 / xt_ref.shape[1]

    def bn_relu(h, gamma, beta):
        # Single-pass batch stats (biased var, torch training mode) + fused affine.
        mean = jnp.sum(h, axis=1, keepdims=True) * inv_b
        mean_sq = jnp.sum(h * h, axis=1, keepdims=True) * inv_b
        var = mean_sq - mean * mean
        scale = gamma * jax.lax.rsqrt(var + EPS)        # EUP rsqrt (free slot)
        shift = beta - mean * scale
        return jnp.maximum(h * scale + shift, 0.0)      # one FMA + ReLU per elem

    # bf16 MXU operands, f32 accumulation.  Linear biases of layers 1-3 are
    # omitted on purpose: BN's mean subtraction cancels them exactly.
    x = xt_ref[...].astype(jnp.bfloat16)
    h = jnp.dot(w1_ref[...], x, preferred_element_type=jnp.float32)
    h = bn_relu(h, g1_ref[...], beta1_ref[...])

    h = jnp.dot(w2_ref[...], h.astype(jnp.bfloat16),
                preferred_element_type=jnp.float32)
    h = bn_relu(h, g2_ref[...], beta2_ref[...])

    h = jnp.dot(w3_ref[...], h.astype(jnp.bfloat16),
                preferred_element_type=jnp.float32)
    h = bn_relu(h, g3_ref[...], beta3_ref[...])

    # fc4 as VPU multiply + sublane reduction (avoids a 1-row MXU matmul).
    o_ref[...] = jnp.sum(h * w4_ref[...], axis=0, keepdims=True) + b4_ref[...]


def init_params(key, input_size):
    """PyTorch-style init. Weights stored (out, in); fc1-3 weights kept in bf16
    (MXU-native, half the DMA/VMEM bytes), BN params and fc4 in f32."""
    dims = [(input_size, 128), (128, 64), (64, 32), (32, 1)]
    keys = jax.random.split(key, 2 * len(dims))
    p = {}
    for li, (fan_in, fan_out) in enumerate(dims, start=1):
        bound = 1.0 / math.sqrt(fan_in)
        w = jax.random.uniform(keys[2 * (li - 1)], (fan_out, fan_in),
                               minval=-bound, maxval=bound, dtype=jnp.float32)
        b = jax.random.uniform(keys[2 * (li - 1) + 1], (fan_out, 1),
                               minval=-bound, maxval=bound, dtype=jnp.float32)
        if li < 4:
            p[f"w{li}"] = w.astype(jnp.bfloat16)
            p[f"b{li}"] = b                      # only used by the reference (BN cancels it)
            p[f"g{li}"] = jnp.ones((fan_out, 1), jnp.float32)
            p[f"beta{li}"] = jnp.zeros((fan_out, 1), jnp.float32)
        else:
            p["w4"] = w.T                        # (32, 1) f32 column for the VPU epilogue
            p["b4"] = b.reshape(1, 1)
    return p


def neural_network_forward(x, params):
    """x: (B, input_size) float32 -> (B, 1) float32."""
    B = x.shape[0]
    xt = x.T  # batch-on-lanes; layout plumbing stays in the wrapper

    kernel_args = (xt,
                   params["w1"], params["g1"], params["beta1"],
                   params["w2"], params["g2"], params["beta2"],
                   params["w3"], params["g3"], params["beta3"],
                   params["w4"], params["b4"])

    full = lambda a: pl.BlockSpec(a.shape, lambda: (0,) * a.ndim)

    # TODO(synk): for large B (>=128/256) tile the batch over a "parallel" grid
    # axis (and shard across v7x's two TensorCores) -- this requires a two-pass
    # or running-stats BatchNorm so statistics stay full-batch consistent.
    out = pl.pallas_call(
        mlp_kernel,
        out_shape=jax.ShapeDtypeStruct((1, B), jnp.float32),
        grid=(),
        in_specs=[full(a) for a in kernel_args],
        out_specs=pl.BlockSpec((1, B), lambda: (0, 0)),
        compiler_params=pltpu.CompilerParams(vmem_limit_bytes=32 << 20),
    )(*kernel_args)
    return out.T  # (B, 1)


def reference_forward(x, p):
    """Pure-JAX reference with the original module's semantics (incl. fc1-3
    biases and the textbook BN formula); same bf16 matmul operands."""
    def bn_relu(h, g, be):
        m = jnp.mean(h, axis=1, keepdims=True)
        v = jnp.mean((h - m) ** 2, axis=1, keepdims=True)
        return jnp.maximum((h - m) * jax.lax.rsqrt(v + EPS) * g + be, 0.0)

    xt = x.T
    h = jnp.dot(p["w1"], xt.astype(jnp.bfloat16),
                preferred_element_type=jnp.float32) + p["b1"]
    h = bn_relu(h, p["g1"], p["beta1"])
    h = jnp.dot(p["w2"], h.astype(jnp.bfloat16),
                preferred_element_type=jnp.float32) + p["b2"]
    h = bn_relu(h, p["g2"], p["beta2"])
    h = jnp.dot(p["w3"], h.astype(jnp.bfloat16),
                preferred_element_type=jnp.float32) + p["b3"]
    h = bn_relu(h, p["g3"], p["beta3"])
    return (p["w4"].T @ h + p["b4"]).T


if __name__ == "__main__":
    key = jax.random.PRNGKey(0)
    k_x, k_p = jax.random.split(key)

    batch, input_size = 8, 16
    x = jax.random.normal(k_x, (batch, input_size), dtype=jnp.float32)
    params = init_params(k_p, input_size)

    out = neural_network_forward(x, params)
    jax.block_until_ready(out)

    ref = reference_forward(x, params)
    assert out.shape == (batch, 1)
    assert jnp.allclose(out, ref, atol=1e-3, rtol=1e-3), \
        float(jnp.max(jnp.abs(out - ref)))

    print("KERNEL_OK")
</pallas_src>

<mosaic_0001>
module attributes {stable_mosaic.version = 11 : i64} {
  func.func @mlp_kernel(%arg0: memref<16x8xf32, #tpu.memory_space<vmem>>, %arg1: memref<128x16xbf16, #tpu.memory_space<vmem>>, %arg2: memref<128x1xf32, #tpu.memory_space<vmem>>, %arg3: memref<128x1xf32, #tpu.memory_space<vmem>>, %arg4: memref<64x128xbf16, #tpu.memory_space<vmem>>, %arg5: memref<64x1xf32, #tpu.memory_space<vmem>>, %arg6: memref<64x1xf32, #tpu.memory_space<vmem>>, %arg7: memref<32x64xbf16, #tpu.memory_space<vmem>>, %arg8: memref<32x1xf32, #tpu.memory_space<vmem>>, %arg9: memref<32x1xf32, #tpu.memory_space<vmem>>, %arg10: memref<32x1xf32, #tpu.memory_space<vmem>>, %arg11: memref<1x1xf32, #tpu.memory_space<vmem>>, %arg12: memref<1x8xf32, #tpu.memory_space<vmem>>) attributes {dimension_semantics = [], scalar_prefetch = 0 : i64, scratch_operands = 0 : i64, tpu.core_type = #tpu.core_type<tc>} {
    %c0 = arith.constant 0 : index
    %c0_0 = arith.constant 0 : index
    %0 = vector.load %arg0[%c0, %c0_0] : memref<16x8xf32, #tpu.memory_space<vmem>>, vector<16x8xf32>
    %1 = arith.truncf %0 : vector<16x8xf32> to vector<16x8xbf16>
    %c0_1 = arith.constant 0 : index
    %c0_2 = arith.constant 0 : index
    %2 = vector.load %arg1[%c0_1, %c0_2] : memref<128x16xbf16, #tpu.memory_space<vmem>>, vector<128x16xbf16>
    %cst = arith.constant dense<0.000000e+00> : vector<128x8xf32>
    %3 = tpu.matmul %2, %1, %cst {dimension_numbers = #tpu.dot_dimension_numbers<[1], [0], [0], [1], [0, 0, 1, 1], [], []>} : vector<128x16xbf16>, vector<16x8xbf16>, vector<128x8xf32> -> vector<128x8xf32>
    %c0_3 = arith.constant 0 : index
    %c0_4 = arith.constant 0 : index
    %4 = vector.load %arg2[%c0_3, %c0_4] : memref<128x1xf32, #tpu.memory_space<vmem>>, vector<128x1xf32>
    %c0_5 = arith.constant 0 : index
    %c0_6 = arith.constant 0 : index
    %5 = vector.load %arg3[%c0_5, %c0_6] : memref<128x1xf32, #tpu.memory_space<vmem>>, vector<128x1xf32>
    %cst_7 = arith.constant dense<0.000000e+00> : vector<128xf32>
    %6 = vector.multi_reduction <add>, %3, %cst_7 [1] : vector<128x8xf32> to vector<128xf32>
    %7 = vector.shape_cast %6 : vector<128xf32> to vector<128x1xf32>
    %cst_8 = arith.constant 1.250000e-01 : f32
    %8 = vector.broadcast %cst_8 : f32 to vector<128x1xf32>
    %9 = arith.mulf %7, %8 : vector<128x1xf32>
    %10 = arith.mulf %3, %3 : vector<128x8xf32>
    %cst_9 = arith.constant dense<0.000000e+00> : vector<128xf32>
    %11 = vector.multi_reduction <add>, %10, %cst_9 [1] : vector<128x8xf32> to vector<128xf32>
    %12 = vector.shape_cast %11 : vector<128xf32> to vector<128x1xf32>
    %cst_10 = arith.constant 1.250000e-01 : f32
    %13 = vector.broadcast %cst_10 : f32 to vector<128x1xf32>
    %14 = arith.mulf %12, %13 : vector<128x1xf32>
    %15 = arith.mulf %9, %9 : vector<128x1xf32>
    %16 = arith.subf %14, %15 : vector<128x1xf32>
    %cst_11 = arith.constant 9.99999974E-6 : f32
    %17 = vector.broadcast %cst_11 : f32 to vector<128x1xf32>
    %18 = arith.addf %16, %17 : vector<128x1xf32>
    %19 = math.rsqrt %18 : vector<128x1xf32>
    %20 = arith.mulf %4, %19 : vector<128x1xf32>
    %21 = arith.mulf %9, %20 : vector<128x1xf32>
    %22 = arith.subf %5, %21 : vector<128x1xf32>
    %23 = vector.broadcast %20 : vector<128x1xf32> to vector<128x8xf32>
    %24 = arith.mulf %3, %23 : vector<128x8xf32>
    %25 = vector.broadcast %22 : vector<128x1xf32> to vector<128x8xf32>
    %26 = arith.addf %24, %25 : vector<128x8xf32>
    %cst_12 = arith.constant 0.000000e+00 : f32
    %27 = vector.broadcast %cst_12 : f32 to vector<128x8xf32>
    %28 = arith.maximumf %26, %27 : vector<128x8xf32>
    %c0_13 = arith.constant 0 : index
    %c0_14 = arith.constant 0 : index
    %29 = vector.load %arg4[%c0_13, %c0_14] : memref<64x128xbf16, #tpu.memory_space<vmem>>, vector<64x128xbf16>
    %30 = arith.truncf %28 : vector<128x8xf32> to vector<128x8xbf16>
    %cst_15 = arith.constant dense<0.000000e+00> : vector<64x8xf32>
    %31 = tpu.matmul %29, %30, %cst_15 {dimension_numbers = #tpu.dot_dimension_numbers<[1], [0], [0], [1], [0, 0, 1, 1], [], []>} : vector<64x128xbf16>, vector<128x8xbf16>, vector<64x8xf32> -> vector<64x8xf32>
    %c0_16 = arith.constant 0 : index
    %c0_17 = arith.constant 0 : index
    %32 = vector.load %arg5[%c0_16, %c0_17] : memref<64x1xf32, #tpu.memory_space<vmem>>, vector<64x1xf32>
    %c0_18 = arith.constant 0 : index
    %c0_19 = arith.constant 0 : index
    %33 = vector.load %arg6[%c0_18, %c0_19] : memref<64x1xf32, #tpu.memory_space<vmem>>, vector<64x1xf32>
    %cst_20 = arith.constant dense<0.000000e+00> : vector<64xf32>
    %34 = vector.multi_reduction <add>, %31, %cst_20 [1] : vector<64x8xf32> to vector<64xf32>
    %35 = vector.shape_cast %34 : vector<64xf32> to vector<64x1xf32>
    %cst_21 = arith.constant 1.250000e-01 : f32
    %36 = vector.broadcast %cst_21 : f32 to vector<64x1xf32>
    %37 = arith.mulf %35, %36 : vector<64x1xf32>
    %38 = arith.mulf %31, %31 : vector<64x8xf32>
    %cst_22 = arith.constant dense<0.000000e+00> : vector<64xf32>
    %39 = vector.multi_reduction <add>, %38, %cst_22 [1] : vector<64x8xf32> to vector<64xf32>
    %40 = vector.shape_cast %39 : vector<64xf32> to vector<64x1xf32>
    %cst_23 = arith.constant 1.250000e-01 : f32
    %41 = vector.broadcast %cst_23 : f32 to vector<64x1xf32>
    %42 = arith.mulf %40, %41 : vector<64x1xf32>
    %43 = arith.mulf %37, %37 : vector<64x1xf32>
    %44 = arith.subf %42, %43 : vector<64x1xf32>
    %cst_24 = arith.constant 9.99999974E-6 : f32
    %45 = vector.broadcast %cst_24 : f32 to vector<64x1xf32>
    %46 = arith.addf %44, %45 : vector<64x1xf32>
    %47 = math.rsqrt %46 : vector<64x1xf32>
    %48 = arith.mulf %32, %47 : vector<64x1xf32>
    %49 = arith.mulf %37, %48 : vector<64x1xf32>
    %50 = arith.subf %33, %49 : vector<64x1xf32>
    %51 = vector.broadcast %48 : vector<64x1xf32> to vector<64x8xf32>
    %52 = arith.mulf %31, %51 : vector<64x8xf32>
    %53 = vector.broadcast %50 : vector<64x1xf32> to vector<64x8xf32>
    %54 = arith.addf %52, %53 : vector<64x8xf32>
    %cst_25 = arith.constant 0.000000e+00 : f32
    %55 = vector.broadcast %cst_25 : f32 to vector<64x8xf32>
    %56 = arith.maximumf %54, %55 : vector<64x8xf32>
    %c0_26 = arith.constant 0 : index
    %c0_27 = arith.constant 0 : index
    %57 = vector.load %arg7[%c0_26, %c0_27] : memref<32x64xbf16, #tpu.memory_space<vmem>>, vector<32x64xbf16>
    %58 = arith.truncf %56 : vector<64x8xf32> to vector<64x8xbf16>
    %cst_28 = arith.constant dense<0.000000e+00> : vector<32x8xf32>
    %59 = tpu.matmul %57, %58, %cst_28 {dimension_numbers = #tpu.dot_dimension_numbers<[1], [0], [0], [1], [0, 0, 1, 1], [], []>} : vector<32x64xbf16>, vector<64x8xbf16>, vector<32x8xf32> -> vector<32x8xf32>
    %c0_29 = arith.constant 0 : index
    %c0_30 = arith.constant 0 : index
    %60 = vector.load %arg8[%c0_29, %c0_30] : memref<32x1xf32, #tpu.memory_space<vmem>>, vector<32x1xf32>
    %c0_31 = arith.constant 0 : index
    %c0_32 = arith.constant 0 : index
    %61 = vector.load %arg9[%c0_31, %c0_32] : memref<32x1xf32, #tpu.memory_space<vmem>>, vector<32x1xf32>
    %cst_33 = arith.constant dense<0.000000e+00> : vector<32xf32>
    %62 = vector.multi_reduction <add>, %59, %cst_33 [1] : vector<32x8xf32> to vector<32xf32>
    %63 = vector.shape_cast %62 : vector<32xf32> to vector<32x1xf32>
    %cst_34 = arith.constant 1.250000e-01 : f32
    %64 = vector.broadcast %cst_34 : f32 to vector<32x1xf32>
    %65 = arith.mulf %63, %64 : vector<32x1xf32>
    %66 = arith.mulf %59, %59 : vector<32x8xf32>
    %cst_35 = arith.constant dense<0.000000e+00> : vector<32xf32>
    %67 = vector.multi_reduction <add>, %66, %cst_35 [1] : vector<32x8xf32> to vector<32xf32>
    %68 = vector.shape_cast %67 : vector<32xf32> to vector<32x1xf32>
    %cst_36 = arith.constant 1.250000e-01 : f32
    %69 = vector.broadcast %cst_36 : f32 to vector<32x1xf32>
    %70 = arith.mulf %68, %69 : vector<32x1xf32>
    %71 = arith.mulf %65, %65 : vector<32x1xf32>
    %72 = arith.subf %70, %71 : vector<32x1xf32>
    %cst_37 = arith.constant 9.99999974E-6 : f32
    %73 = vector.broadcast %cst_37 : f32 to vector<32x1xf32>
    %74 = arith.addf %72, %73 : vector<32x1xf32>
    %75 = math.rsqrt %74 : vector<32x1xf32>
    %76 = arith.mulf %60, %75 : vector<32x1xf32>
    %77 = arith.mulf %65, %76 : vector<32x1xf32>
    %78 = arith.subf %61, %77 : vector<32x1xf32>
    %79 = vector.broadcast %76 : vector<32x1xf32> to vector<32x8xf32>
    %80 = arith.mulf %59, %79 : vector<32x8xf32>
    %81 = vector.broadcast %78 : vector<32x1xf32> to vector<32x8xf32>
    %82 = arith.addf %80, %81 : vector<32x8xf32>
    %cst_38 = arith.constant 0.000000e+00 : f32
    %83 = vector.broadcast %cst_38 : f32 to vector<32x8xf32>
    %84 = arith.maximumf %82, %83 : vector<32x8xf32>
    %c0_39 = arith.constant 0 : index
    %c0_40 = arith.constant 0 : index
    %85 = vector.load %arg10[%c0_39, %c0_40] : memref<32x1xf32, #tpu.memory_space<vmem>>, vector<32x1xf32>
    %86 = vector.broadcast %85 : vector<32x1xf32> to vector<32x8xf32>
    %87 = arith.mulf %84, %86 : vector<32x8xf32>
    %cst_41 = arith.constant dense<0.000000e+00> : vector<8xf32>
    %88 = vector.multi_reduction <add>, %87, %cst_41 [0] : vector<32x8xf32> to vector<8xf32>
    %89 = vector.shape_cast %88 : vector<8xf32> to vector<1x8xf32>
    %c0_42 = arith.constant 0 : index
    %c0_43 = arith.constant 0 : index
    %90 = vector.load %arg11[%c0_42, %c0_43] : memref<1x1xf32, #tpu.memory_space<vmem>>, vector<1x1xf32>
    %91 = vector.broadcast %90 : vector<1x1xf32> to vector<1x8xf32>
    %92 = arith.addf %89, %91 : vector<1x8xf32>
    %c0_44 = arith.constant 0 : index
    %c0_45 = arith.constant 0 : index
    %93 = vector.load %arg12[%c0_44, %c0_45] : memref<1x8xf32, #tpu.memory_space<vmem>>, vector<1x8xf32>
    tpu.vector_store %arg12[%c0_44, %c0_45], %92 {strides = array<i32>} : memref<1x8xf32, #tpu.memory_space<vmem>>, vector<1x8xf32>,
    return
  }
}

</mosaic_0001>

<llo_original>
// kernel: tpu_custom_call.1
$region0: #{tpu_custom_call.1}
  #allocation0 [shape = 'u32[]', space=smem, size = 0x4, offset = 0x4, fixed_abs, tag = 'smem constant byte address 0x4 - core index']
  #allocation1 [shape = 'u32[144,128]{1,0:T(1,128)}', space=vmem, size = 0x12000, scoped, tag = 'internal scratch']
  #allocation2 [shape = 'f32[1,1]{1,0:T(1,128)S(1)}', space=vmem, size = 0x200, scoped, tag = 'scoped memory for tpu_custom_call.1']
  %s0 = inlined_call_operand.vmem [shape: f32[16,8], index: 0, kind: input, shape index: {}]
  %s1 = inlined_call_operand.vmem [shape: bf16[128,16], index: 1, kind: input, shape index: {}]
  %s2 = inlined_call_operand.vmem [shape: f32[128,1], index: 2, kind: input, shape index: {}]
  %s3 = inlined_call_operand.vmem [shape: f32[128,1], index: 3, kind: input, shape index: {}]
  %s4 = inlined_call_operand.vmem [shape: bf16[64,128], index: 4, kind: input, shape index: {}]
  %s5 = inlined_call_operand.vmem [shape: f32[64,1], index: 5, kind: input, shape index: {}]
  %s6 = inlined_call_operand.vmem [shape: f32[64,1], index: 6, kind: input, shape index: {}]
  %s7 = inlined_call_operand.vmem [shape: bf16[32,64], index: 7, kind: input, shape index: {}]
  %s8 = inlined_call_operand.vmem [shape: f32[32,1], index: 8, kind: input, shape index: {}]
  %s9 = inlined_call_operand.vmem [shape: f32[32,1], index: 9, kind: input, shape index: {}]
  %s10 = inlined_call_operand.vmem [shape: f32[32,1], index: 10, kind: input, shape index: {}]
  %s11 = inlined_call_operand.<no memory space> [shape: f32[1,1], index: 11, kind: input, shape index: {}]
  %s12 = inlined_call_operand.hbm [shape: f32[1,8], index: 12, kind: output, shape index: {}]
  %s13 = sld [smem:[#allocation0]]
  $region58: #{tpu_custom_call.1} parent=0
    _
  %s15 = ssub.s32 1, %s13
  %s16 = scalar_select 0, %s15, %s13
  %v17 = vstv %s11
  %18 = vst [vmem:[#allocation2] sm:$0x1] %v17
  $region1: #{tpu_custom_call.1} parent=0
    #allocation3 [shape = 'u8[512]{0}', space=vmem, size = 0x400, scoped, tag = 'output window, operand 0, single buffered']
    #allocation4 [shape = 's32[1]{0}', space=sflag, size = 0x4, scoped, tag = 'scoped memory for tpu_custom_call.1']
    %19 = vsyncpa [#allocation4], 0
    // Predicated region
    $region2: #{tpu_custom_call.1} parent=1 // pred_check
      _
    $region3: #{tpu_custom_call.1} parent=1 // pred_check_branch
      %21 = sbr.rel (0) target = $region5
    $region4: #{tpu_custom_call.1} parent=1 // pred_region
      _
    $region5: #{tpu_custom_call.1} parent=1 // pred_fallthru
      _
    // Predicated region
    $region6: #{tpu_custom_call.1} parent=1 // pred_check
      _
    $region7: #{tpu_custom_call.1} parent=1 // pred_check_branch
      %23 = sbr.rel (0) target = $region9
    $region8: #{tpu_custom_call.1} parent=1 // pred_region
      _
    $region9: #{tpu_custom_call.1} parent=1 // pred_fallthru
      _
    // Predicated region
    $region10: #{tpu_custom_call.1} parent=1 // pred_check
      _
    $region11: #{tpu_custom_call.1} parent=1 // pred_check_branch
      %25 = sbr.rel (0) target = $region13
    $region12: #{tpu_custom_call.1} parent=1 // pred_region
      _
    $region13: #{tpu_custom_call.1} parent=1 // pred_fallthru
      _
    // Predicated region
    $region14: #{tpu_custom_call.1} parent=1 // pred_check
      _
    $region15: #{tpu_custom_call.1} parent=1 // pred_check_branch
      %27 = sbr.rel (0) target = $region17
    $region16: #{tpu_custom_call.1} parent=1 // pred_region
      _
    $region17: #{tpu_custom_call.1} parent=1 // pred_fallthru
      _
    // Predicated region
    $region18: #{tpu_custom_call.1} parent=1 // pred_check
      _
    $region19: #{tpu_custom_call.1} parent=1 // pred_check_branch
      %29 = sbr.rel (0) target = $region21
    $region20: #{tpu_custom_call.1} parent=1 // pred_region
      _
    $region21: #{tpu_custom_call.1} parent=1 // pred_fallthru
      _
    // Predicated region
    $region22: #{tpu_custom_call.1} parent=1 // pred_check
      _
    $region23: #{tpu_custom_call.1} parent=1 // pred_check_branch
      %31 = sbr.rel (0) target = $region25
    $region24: #{tpu_custom_call.1} parent=1 // pred_region
      _
    $region25: #{tpu_custom_call.1} parent=1 // pred_fallthru
      _
    // Predicated region
    $region26: #{tpu_custom_call.1} parent=1 // pred_check
      _
    $region27: #{tpu_custom_call.1} parent=1 // pred_check_branch
      %33 = sbr.rel (0) target = $region29
    $region28: #{tpu_custom_call.1} parent=1 // pred_region
      _
    $region29: #{tpu_custom_call.1} parent=1 // pred_fallthru
      _
    // Predicated region
    $region30: #{tpu_custom_call.1} parent=1 // pred_check
      _
    $region31: #{tpu_custom_call.1} parent=1 // pred_check_branch
      %35 = sbr.rel (0) target = $region33
    $region32: #{tpu_custom_call.1} parent=1 // pred_region
      _
    $region33: #{tpu_custom_call.1} parent=1 // pred_fallthru
      _
    // Predicated region
    $region34: #{tpu_custom_call.1} parent=1 // pred_check
      _
    $region35: #{tpu_custom_call.1} parent=1 // pred_check_branch
      %37 = sbr.rel (0) target = $region37
    $region36: #{tpu_custom_call.1} parent=1 // pred_region
      _
    $region37: #{tpu_custom_call.1} parent=1 // pred_fallthru
      _
    // Predicated region
    $region38: #{tpu_custom_call.1} parent=1 // pred_check
      _
    $region39: #{tpu_custom_call.1} parent=1 // pred_check_branch
      %39 = sbr.rel (0) target = $region41
    $region40: #{tpu_custom_call.1} parent=1 // pred_region
      _
    $region41: #{tpu_custom_call.1} parent=1 // pred_fallthru
      _
    // Predicated region
    $region42: #{tpu_custom_call.1} parent=1 // pred_check
      _
    $region43: #{tpu_custom_call.1} parent=1 // pred_check_branch
      %41 = sbr.rel (0) target = $region45
    $region44: #{tpu_custom_call.1} parent=1 // pred_region
      _
    $region45: #{tpu_custom_call.1} parent=1 // pred_fallthru
      _
    // Predicated region
    $region46: #{tpu_custom_call.1} parent=1 // pred_check
      _
    $region47: #{tpu_custom_call.1} parent=1 // pred_check_branch
      %43 = sbr.rel (0) target = $region49
    $region48: #{tpu_custom_call.1} parent=1 // pred_region
      _
    $region49: #{tpu_custom_call.1} parent=1 // pred_fallthru
      _
    %v45 = vld [vmem:[%s0] sm:$0xff]
    %v46 = vld [vmem:[%s0 + $0x8] sm:$0xff]
    %v47 = vpack.c.bf16 %v46, %v45
    %v48 = vld [vmem:[%s1] sm:$0xf]
    %v49 = vld [vmem:[%s1 + $0x4] sm:$0xf]
    %v50 = vld [vmem:[%s1 + $0x8] sm:$0xf]
    %v51 = vld [vmem:[%s1 + $0xc] sm:$0xf]
    %v52 = vld [vmem:[%s1 + $0x10] sm:$0xf]
    %v53 = vld [vmem:[%s1 + $0x14] sm:$0xf]
    %v54 = vld [vmem:[%s1 + $0x18] sm:$0xf]
    %v55 = vld [vmem:[%s1 + $0x1c] sm:$0xf]
    %v56 = vld [vmem:[%s1 + $0x20] sm:$0xf]
    %v57 = vld [vmem:[%s1 + $0x24] sm:$0xf]
    %v58 = vld [vmem:[%s1 + $0x28] sm:$0xf]
    %v59 = vld [vmem:[%s1 + $0x2c] sm:$0xf]
    %v60 = vld [vmem:[%s1 + $0x30] sm:$0xf]
    %v61 = vld [vmem:[%s1 + $0x34] sm:$0xf]
    %v62 = vld [vmem:[%s1 + $0x38] sm:$0xf]
    %v63 = vld [vmem:[%s1 + $0x3c] sm:$0xf]
    %v80 = vunpack.c.l.b16 %v48
    %v81 = vunpack.c.l.b16 %v49
    %v82 = vunpack.c.l.b16 %v50
    %v83 = vunpack.c.l.b16 %v51
    %v84 = vunpack.c.l.b16 %v52
    %v85 = vunpack.c.l.b16 %v53
    %v86 = vunpack.c.l.b16 %v54
    %v87 = vunpack.c.l.b16 %v55
    %v88 = vunpack.c.l.b16 %v56
    %v89 = vunpack.c.l.b16 %v57
    %v90 = vunpack.c.l.b16 %v58
    %v91 = vunpack.c.l.b16 %v59
    %v92 = vunpack.c.l.b16 %v60
    %v93 = vunpack.c.l.b16 %v61
    %v94 = vunpack.c.l.b16 %v62
    %v95 = vunpack.c.l.b16 %v63
    %v96 = vpack.c.b16 %v81, %v80
    %v97 = vpack.c.b16 %v83, %v82
    %v98 = vpack.c.b16 %v85, %v84
    %v99 = vpack.c.b16 %v87, %v86
    %v100 = vpack.c.b16 %v89, %v88
    %v101 = vpack.c.b16 %v91, %v90
    %v102 = vpack.c.b16 %v93, %v92
    %v103 = vpack.c.b16 %v95, %v94
    %vm104 = vcmask 130048
    %v106 = vsel %vm104, %v96, 0
    %v109 = vsel %vm104, %v97, 0
    %v112 = vsel %vm104, %v98, 0
    %v115 = vsel %vm104, %v99, 0
    %v118 = vsel %vm104, %v100, 0
    %v121 = vsel %vm104, %v101, 0
    %v124 = vsel %vm104, %v102, 0
    %v127 = vsel %vm104, %v103, 0
    %129 = vmatprep.subr.bf16.mxu0 0
    %130 = vmatpush1.bf16.msra.mxu0 %v47
    %131 = vmatprep.subr.bf16.mxu0 0
    %132 = vmatpush1.bf16.msra.mxu0 0
    %133 = vmatprep.subr.bf16.mxu0 0
    %134 = vmatpush1.bf16.msra.mxu0 0
    %135 = vmatprep.subr.bf16.mxu0 0
    %136 = vmatpush1.bf16.msra.mxu0 0
    %137 = vmatprep.subr.bf16.mxu0 0
    %138 = vmatpush1.bf16.msra.mxu0 0
    %139 = vmatprep.subr.bf16.mxu0 0
    %140 = vmatpush1.bf16.msra.mxu0 0
    %141 = vmatprep.subr.bf16.mxu0 0
    %142 = vmatpush1.bf16.msra.mxu0 0
    %143 = vmatprep.subr.bf16.mxu0 0
    %144 = vmatpush1.bf16.msra.mxu0 0
    %145 = vmatprep.subr.bf16.mxu0 0
    %146 = vmatpush1.bf16.msra.mxu0 0
    %147 = vmatprep.subr.bf16.mxu0 0
    %148 = vmatpush1.bf16.msra.mxu0 0
    %149 = vmatprep.subr.bf16.mxu0 0
    %150 = vmatpush1.bf16.msra.mxu0 0
    %151 = vmatprep.subr.bf16.mxu0 0
    %152 = vmatpush1.bf16.msra.mxu0 0
    %153 = vmatprep.subr.bf16.mxu0 0
    %154 = vmatpush1.bf16.msra.mxu0 0
    %155 = vmatprep.subr.bf16.mxu0 0
    %156 = vmatpush1.bf16.msra.mxu0 0
    %157 = vmatprep.subr.bf16.mxu0 0
    %158 = vmatpush1.bf16.msra.mxu0 0
    %159 = vmatprep.subr.bf16.mxu0 0
    %160 = vmatpush1.bf16.msra.mxu0 0
    %161 = vmatprep.mubr.bf16.mxu0 0
    %162 = vmatmul.mubr.bf16.gmra.mrb[0].mxu0 %v106
    %v163 = vpop.f32.mrb[0].mxu0
    %v164 = vadd.f32 0.0, %v163
    %v165 = vpop.f32.mrb[0].mxu0
    %v166 = vpop.f32.mrb[0].mxu0
    %v167 = vadd.f32 0.0, %v166
    %v168 = vpop.f32.mrb[0].mxu0
    %169 = vmatprep.mubr.bf16.mxu0 0
    %170 = vmatmul.mubr.bf16.gmra.mrb[0].mxu0 %v109
    %v171 = vpop.f32.mrb[0].mxu0
    %v172 = vadd.f32 0.0, %v171
    %v173 = vpop.f32.mrb[0].mxu0
    %v174 = vpop.f32.mrb[0].mxu0
    %v175 = vadd.f32 0.0, %v174
    %v176 = vpop.f32.mrb[0].mxu0
    %177 = vmatprep.mubr.bf16.mxu0 0
    %178 = vmatmul.mubr.bf16.gmra.mrb[0].mxu0 %v112
    %v179 = vpop.f32.mrb[0].mxu0
    %v180 = vadd.f32 0.0, %v179
    %v181 = vpop.f32.mrb[0].mxu0
    %v182 = vpop.f32.mrb[0].mxu0
    %v183 = vadd.f32 0.0, %v182
    %v184 = vpop.f32.mrb[0].mxu0
    %185 = vmatprep.mubr.bf16.mxu0 0
    %186 = vmatmul.mubr.bf16.gmra.mrb[0].mxu0 %v115
    %v187 = vpop.f32.mrb[0].mxu0
    %v188 = vadd.f32 0.0, %v187
    %v189 = vpop.f32.mrb[0].mxu0
    %v190 = vpop.f32.mrb[0].mxu0
    %v191 = vadd.f32 0.0, %v190
    %v192 = vpop.f32.mrb[0].mxu0
    %193 = vmatprep.mubr.bf16.mxu0 0
    %194 = vmatmul.mubr.bf16.gmra.mrb[0].mxu0 %v118
    %v195 = vpop.f32.mrb[0].mxu0
    %v196 = vadd.f32 0.0, %v195
    %v197 = vpop.f32.mrb[0].mxu0
    %v198 = vpop.f32.mrb[0].mxu0
    %v199 = vadd.f32 0.0, %v198
    %v200 = vpop.f32.mrb[0].mxu0
    %201 = vmatprep.mubr.bf16.mxu0 0
    %202 = vmatmul.mubr.bf16.gmra.mrb[0].mxu0 %v121
    %v203 = vpop.f32.mrb[0].mxu0
    %v204 = vadd.f32 0.0, %v203
    %v205 = vpop.f32.mrb[0].mxu0
    %v206 = vpop.f32.mrb[0].mxu0
    %v207 = vadd.f32 0.0, %v206
    %v208 = vpop.f32.mrb[0].mxu0
    %209 = vmatprep.mubr.bf16.mxu0 0
    %210 = vmatmul.mubr.bf16.gmra.mrb[0].mxu0 %v124
    %v211 = vpop.f32.mrb[0].mxu0
    %v212 = vadd.f32 0.0, %v211
    %v213 = vpop.f32.mrb[0].mxu0
    %v214 = vpop.f32.mrb[0].mxu0
    %v215 = vadd.f32 0.0, %v214
    %v216 = vpop.f32.mrb[0].mxu0
    %217 = vmatprep.mubr.bf16.mxu0 0
    %218 = vmatmul.mubr.bf16.gmra.mrb[0].mxu0 %v127
    %v219 = vpop.f32.mrb[0].mxu0
    %v220 = vadd.f32 0.0, %v219
    %v221 = vpop.f32.mrb[0].mxu0
    %v222 = vpop.f32.mrb[0].mxu0
    %v223 = vadd.f32 0.0, %v222
    %v224 = vpop.f32.mrb[0].mxu0
    %225 = vdwg.mxu0
    %v226 = vld [vmem:[%s2] sm:$0xff]
    %v227 = vld [vmem:[%s2 + $0x8] sm:$0xff]
    %v228 = vld [vmem:[%s2 + $0x10] sm:$0xff]
    %v229 = vld [vmem:[%s2 + $0x18] sm:$0xff]
    %v230 = vld [vmem:[%s2 + $0x20] sm:$0xff]
    %v231 = vld [vmem:[%s2 + $0x28] sm:$0xff]
    %v232 = vld [vmem:[%s2 + $0x30] sm:$0xff]
    %v233 = vld [vmem:[%s2 + $0x38] sm:$0xff]
    %v234 = vld [vmem:[%s2 + $0x40] sm:$0xff]
    %v235 = vld [vmem:[%s2 + $0x48] sm:$0xff]
    %v236 = vld [vmem:[%s2 + $0x50] sm:$0xff]
    %v237 = vld [vmem:[%s2 + $0x58] sm:$0xff]
    %v238 = vld [vmem:[%s2 + $0x60] sm:$0xff]
    %v239 = vld [vmem:[%s2 + $0x68] sm:$0xff]
    %v240 = vld [vmem:[%s2 + $0x70] sm:$0xff]
    %v241 = vld [vmem:[%s2 + $0x78] sm:$0xff]
    %v242 = vld [vmem:[%s3] sm:$0xff]
    %v243 = vld [vmem:[%s3 + $0x8] sm:$0xff]
    %v244 = vld [vmem:[%s3 + $0x10] sm:$0xff]
    %v245 = vld [vmem:[%s3 + $0x18] sm:$0xff]
    %v246 = vld [vmem:[%s3 + $0x20] sm:$0xff]
    %v247 = vld [vmem:[%s3 + $0x28] sm:$0xff]
    %v248 = vld [vmem:[%s3 + $0x30] sm:$0xff]
    %v249 = vld [vmem:[%s3 + $0x38] sm:$0xff]
    %v250 = vld [vmem:[%s3 + $0x40] sm:$0xff]
    %v251 = vld [vmem:[%s3 + $0x48] sm:$0xff]
    %v252 = vld [vmem:[%s3 + $0x50] sm:$0xff]
    %v253 = vld [vmem:[%s3 + $0x58] sm:$0xff]
    %v254 = vld [vmem:[%s3 + $0x60] sm:$0xff]
    %v255 = vld [vmem:[%s3 + $0x68] sm:$0xff]
    %v256 = vld [vmem:[%s3 + $0x70] sm:$0xff]
    %v257 = vld [vmem:[%s3 + $0x78] sm:$0xff]
    %vm258 = vcmask 64512
    %v259 = vsel %vm258, %v164, 0.0
    %260 = vadd.xlane.f32.xlu0 %v259
    %v261 = vpop.xlane.xlu0 %260
    %v262 = vsel %vm258, %v167, 0.0
    %263 = vadd.xlane.f32.xlu0 %v262
    %v264 = vpop.xlane.xlu0 %263
    %v265 = vsel %vm258, %v172, 0.0
    %266 = vadd.xlane.f32.xlu0 %v265
    %v267 = vpop.xlane.xlu0 %266
    %v268 = vsel %vm258, %v175, 0.0
    %269 = vadd.xlane.f32.xlu0 %v268
    %v270 = vpop.xlane.xlu0 %269
    %v271 = vsel %vm258, %v180, 0.0
    %272 = vadd.xlane.f32.xlu0 %v271
    %v273 = vpop.xlane.xlu0 %272
    %v274 = vsel %vm258, %v183, 0.0
    %275 = vadd.xlane.f32.xlu0 %v274
    %v276 = vpop.xlane.xlu0 %275
    %v277 = vsel %vm258, %v188, 0.0
    %278 = vadd.xlane.f32.xlu0 %v277
    %v279 = vpop.xlane.xlu0 %278
    %v280 = vsel %vm258, %v191, 0.0
    %281 = vadd.xlane.f32.xlu0 %v280
    %v282 = vpop.xlane.xlu0 %281
    %v283 = vsel %vm258, %v196, 0.0
    %284 = vadd.xlane.f32.xlu0 %v283
    %v285 = vpop.xlane.xlu0 %284
    %v286 = vsel %vm258, %v199, 0.0
    %287 = vadd.xlane.f32.xlu0 %v286
    %v288 = vpop.xlane.xlu0 %287
    %v289 = vsel %vm258, %v204, 0.0
    %290 = vadd.xlane.f32.xlu0 %v289
    %v291 = vpop.xlane.xlu0 %290
    %v292 = vsel %vm258, %v207, 0.0
    %293 = vadd.xlane.f32.xlu0 %v292
    %v294 = vpop.xlane.xlu0 %293
    %v295 = vsel %vm258, %v212, 0.0
    %296 = vadd.xlane.f32.xlu0 %v295
    %v297 = vpop.xlane.xlu0 %296
    %v298 = vsel %vm258, %v215, 0.0
    %299 = vadd.xlane.f32.xlu0 %v298
    %v300 = vpop.xlane.xlu0 %299
    %v301 = vsel %vm258, %v220, 0.0
    %302 = vadd.xlane.f32.xlu0 %v301
    %v303 = vpop.xlane.xlu0 %302
    %v304 = vsel %vm258, %v223, 0.0
    %305 = vadd.xlane.f32.xlu0 %v304
    %v306 = vpop.xlane.xlu0 %305
    %v307 = vmul.f32 %v261, 0.125
    %v308 = vmul.f32 %v264, 0.125
    %v309 = vmul.f32 %v267, 0.125
    %v310 = vmul.f32 %v270, 0.125
    %v311 = vmul.f32 %v273, 0.125
    %v312 = vmul.f32 %v276, 0.125
    %v313 = vmul.f32 %v279, 0.125
    %v314 = vmul.f32 %v282, 0.125
    %v315 = vmul.f32 %v285, 0.125
    %v316 = vmul.f32 %v288, 0.125
    %v317 = vmul.f32 %v291, 0.125
    %v318 = vmul.f32 %v294, 0.125
    %v319 = vmul.f32 %v297, 0.125
    %v320 = vmul.f32 %v300, 0.125
    %v321 = vmul.f32 %v303, 0.125
    %v322 = vmul.f32 %v306, 0.125
    %v323 = vmul.f32 %v164, %v164
    %v324 = vmul.f32 %v167, %v167
    %v325 = vmul.f32 %v172, %v172
    %v326 = vmul.f32 %v175, %v175
    %v327 = vmul.f32 %v180, %v180
    %v328 = vmul.f32 %v183, %v183
    %v329 = vmul.f32 %v188, %v188
    %v330 = vmul.f32 %v191, %v191
    %v331 = vmul.f32 %v196, %v196
    %v332 = vmul.f32 %v199, %v199
    %v333 = vmul.f32 %v204, %v204
    %v334 = vmul.f32 %v207, %v207
    %v335 = vmul.f32 %v212, %v212
    %v336 = vmul.f32 %v215, %v215
    %v337 = vmul.f32 %v220, %v220
    %v338 = vmul.f32 %v223, %v223
    %v339 = vsel %vm258, %v323, 0.0
    %340 = vadd.xlane.f32.xlu0 %v339
    %v341 = vpop.xlane.xlu0 %340
    %v342 = vsel %vm258, %v324, 0.0
    %343 = vadd.xlane.f32.xlu0 %v342
    %v344 = vpop.xlane.xlu0 %343
    %v345 = vsel %vm258, %v325, 0.0
    %346 = vadd.xlane.f32.xlu0 %v345
    %v347 = vpop.xlane.xlu0 %346
    %v348 = vsel %vm258, %v326, 0.0
    %349 = vadd.xlane.f32.xlu0 %v348
    %v350 = vpop.xlane.xlu0 %349
    %v351 = vsel %vm258, %v327, 0.0
    %352 = vadd.xlane.f32.xlu0 %v351
    %v353 = vpop.xlane.xlu0 %352
    %v354 = vsel %vm258, %v328, 0.0
    %355 = vadd.xlane.f32.xlu0 %v354
    %v356 = vpop.xlane.xlu0 %355
    %v357 = vsel %vm258, %v329, 0.0
    %358 = vadd.xlane.f32.xlu0 %v357
    %v359 = vpop.xlane.xlu0 %358
    %v360 = vsel %vm258, %v330, 0.0
    %361 = vadd.xlane.f32.xlu0 %v360
    %v362 = vpop.xlane.xlu0 %361
    %v363 = vsel %vm258, %v331, 0.0
    %364 = vadd.xlane.f32.xlu0 %v363
    %v365 = vpop.xlane.xlu0 %364
    %v366 = vsel %vm258, %v332, 0.0
    %367 = vadd.xlane.f32.xlu0 %v366
    %v368 = vpop.xlane.xlu0 %367
    %v369 = vsel %vm258, %v333, 0.0
    %370 = vadd.xlane.f32.xlu0 %v369
    %v371 = vpop.xlane.xlu0 %370
    %v372 = vsel %vm258, %v334, 0.0
    %373 = vadd.xlane.f32.xlu0 %v372
    %v374 = vpop.xlane.xlu0 %373
    %v375 = vsel %vm258, %v335, 0.0
    %376 = vadd.xlane.f32.xlu0 %v375
    %v377 = vpop.xlane.xlu0 %376
    %v378 = vsel %vm258, %v336, 0.0
    %379 = vadd.xlane.f32.xlu0 %v378
    %v380 = vpop.xlane.xlu0 %379
    %v381 = vsel %vm258, %v337, 0.0
    %382 = vadd.xlane.f32.xlu0 %v381
    %v383 = vpop.xlane.xlu0 %382
    %v384 = vsel %vm258, %v338, 0.0
    %385 = vadd.xlane.f32.xlu0 %v384
    %v386 = vpop.xlane.xlu0 %385
    %v387 = vmul.f32 %v341, 0.125
    %v388 = vmul.f32 %v344, 0.125
    %v389 = vmul.f32 %v347, 0.125
    %v390 = vmul.f32 %v350, 0.125
    %v391 = vmul.f32 %v353, 0.125
    %v392 = vmul.f32 %v356, 0.125
    %v393 = vmul.f32 %v359, 0.125
    %v394 = vmul.f32 %v362, 0.125
    %v395 = vmul.f32 %v365, 0.125
    %v396 = vmul.f32 %v368, 0.125
    %v397 = vmul.f32 %v371, 0.125
    %v398 = vmul.f32 %v374, 0.125
    %v399 = vmul.f32 %v377, 0.125
    %v400 = vmul.f32 %v380, 0.125
    %v401 = vmul.f32 %v383, 0.125
    %v402 = vmul.f32 %v386, 0.125
    %v403 = vmul.f32 %v307, %v307
    %v404 = vmul.f32 %v308, %v308
    %v405 = vmul.f32 %v309, %v309
    %v406 = vmul.f32 %v310, %v310
    %v407 = vmul.f32 %v311, %v311
    %v408 = vmul.f32 %v312, %v312
    %v409 = vmul.f32 %v313, %v313
    %v410 = vmul.f32 %v314, %v314
    %v411 = vmul.f32 %v315, %v315
    %v412 = vmul.f32 %v316, %v316
    %v413 = vmul.f32 %v317, %v317
    %v414 = vmul.f32 %v318, %v318
    %v415 = vmul.f32 %v319, %v319
    %v416 = vmul.f32 %v320, %v320
    %v417 = vmul.f32 %v321, %v321
    %v418 = vmul.f32 %v322, %v322
    %v419 = vsub.f32 %v387, %v403
    %v420 = vsub.f32 %v388, %v404
    %v421 = vsub.f32 %v389, %v405
    %v422 = vsub.f32 %v390, %v406
    %v423 = vsub.f32 %v391, %v407
    %v424 = vsub.f32 %v392, %v408
    %v425 = vsub.f32 %v393, %v409
    %v426 = vsub.f32 %v394, %v410
    %v427 = vsub.f32 %v395, %v411
    %v428 = vsub.f32 %v396, %v412
    %v429 = vsub.f32 %v397, %v413
    %v430 = vsub.f32 %v398, %v414
    %v431 = vsub.f32 %v399, %v415
    %v432 = vsub.f32 %v400, %v416
    %v433 = vsub.f32 %v401, %v417
    %v434 = vsub.f32 %v402, %v418
    %v435 = vadd.f32 %v419, 1e-05
    %v436 = vadd.f32 %v420, 1e-05
    %v437 = vadd.f32 %v421, 1e-05
    %v438 = vadd.f32 %v422, 1e-05
    %v439 = vadd.f32 %v423, 1e-05
    %v440 = vadd.f32 %v424, 1e-05
    %v441 = vadd.f32 %v425, 1e-05
    %v442 = vadd.f32 %v426, 1e-05
    %v443 = vadd.f32 %v427, 1e-05
    %v444 = vadd.f32 %v428, 1e-05
    %v445 = vadd.f32 %v429, 1e-05
    %v446 = vadd.f32 %v430, 1e-05
    %v447 = vadd.f32 %v431, 1e-05
    %v448 = vadd.f32 %v432, 1e-05
    %v449 = vadd.f32 %v433, 1e-05
    %v450 = vadd.f32 %v434, 1e-05
    %v451 = vrsqrt.pop %v435
    %v452 = vrsqrt.pop %v436
    %v453 = vrsqrt.pop %v437
    %v454 = vrsqrt.pop %v438
    %v455 = vrsqrt.pop %v439
    %v456 = vrsqrt.pop %v440
    %v457 = vrsqrt.pop %v441
    %v458 = vrsqrt.pop %v442
    %v459 = vrsqrt.pop %v443
    %v460 = vrsqrt.pop %v444
    %v461 = vrsqrt.pop %v445
    %v462 = vrsqrt.pop %v446
    %v463 = vrsqrt.pop %v447
    %v464 = vrsqrt.pop %v448
    %v465 = vrsqrt.pop %v449
    %v466 = vrsqrt.pop %v450
    %v467 = vmul.f32 %v226, %v451
    %v468 = vmul.f32 %v227, %v452
    %v469 = vmul.f32 %v228, %v453
    %v470 = vmul.f32 %v229, %v454
    %v471 = vmul.f32 %v230, %v455
    %v472 = vmul.f32 %v231, %v456
    %v473 = vmul.f32 %v232, %v457
    %v474 = vmul.f32 %v233, %v458
    %v475 = vmul.f32 %v234, %v459
    %v476 = vmul.f32 %v235, %v460
    %v477 = vmul.f32 %v236, %v461
    %v478 = vmul.f32 %v237, %v462
    %v479 = vmul.f32 %v238, %v463
    %v480 = vmul.f32 %v239, %v464
    %v481 = vmul.f32 %v240, %v465
    %v482 = vmul.f32 %v241, %v466
    %v483 = vmul.f32 %v307, %v467
    %v484 = vmul.f32 %v308, %v468
    %v485 = vmul.f32 %v309, %v469
    %v486 = vmul.f32 %v310, %v470
    %v487 = vmul.f32 %v311, %v471
    %v488 = vmul.f32 %v312, %v472
    %v489 = vmul.f32 %v313, %v473
    %v490 = vmul.f32 %v314, %v474
    %v491 = vmul.f32 %v315, %v475
    %v492 = vmul.f32 %v316, %v476
    %v493 = vmul.f32 %v317, %v477
    %v494 = vmul.f32 %v318, %v478
    %v495 = vmul.f32 %v319, %v479
    %v496 = vmul.f32 %v320, %v480
    %v497 = vmul.f32 %v321, %v481
    %v498 = vmul.f32 %v322, %v482
    %v499 = vsub.f32 %v242, %v483
    %v500 = vsub.f32 %v243, %v484
    %v501 = vsub.f32 %v244, %v485
    %v502 = vsub.f32 %v245, %v486
    %v503 = vsub.f32 %v246, %v487
    %v504 = vsub.f32 %v247, %v488
    %v505 = vsub.f32 %v248, %v489
    %v506 = vsub.f32 %v249, %v490
    %v507 = vsub.f32 %v250, %v491
    %v508 = vsub.f32 %v251, %v492
    %v509 = vsub.f32 %v252, %v493
    %v510 = vsub.f32 %v253, %v494
    %v511 = vsub.f32 %v254, %v495
    %v512 = vsub.f32 %v255, %v496
    %v513 = vsub.f32 %v256, %v497
    %v514 = vsub.f32 %v257, %v498
    %516 = vset.pattern.permute.xlu0 0
    %517 = vperm.xlu0 %516, %v467
    %v518 = vpop.permute.xlu0 %517
    %521 = vset.pattern.permute.xlu0 0
    %522 = vperm.xlu0 %521, %v468
    %v523 = vpop.permute.xlu0 %522
    %526 = vset.pattern.permute.xlu0 0
    %527 = vperm.xlu0 %526, %v469
    %v528 = vpop.permute.xlu0 %527
    %531 = vset.pattern.permute.xlu0 0
    %532 = vperm.xlu0 %531, %v470
    %v533 = vpop.permute.xlu0 %532
    %536 = vset.pattern.permute.xlu0 0
    %537 = vperm.xlu0 %536, %v471
    %v538 = vpop.permute.xlu0 %537
    %541 = vset.pattern.permute.xlu0 0
    %542 = vperm.xlu0 %541, %v472
    %v543 = vpop.permute.xlu0 %542
    %546 = vset.pattern.permute.xlu0 0
    %547 = vperm.xlu0 %546, %v473
    %v548 = vpop.permute.xlu0 %547
    %551 = vset.pattern.permute.xlu0 0
    %552 = vperm.xlu0 %551, %v474
    %v553 = vpop.permute.xlu0 %552
    %556 = vset.pattern.permute.xlu0 0
    %557 = vperm.xlu0 %556, %v475
    %v558 = vpop.permute.xlu0 %557
    %561 = vset.pattern.permute.xlu0 0
    %562 = vperm.xlu0 %561, %v476
    %v563 = vpop.permute.xlu0 %562
    %566 = vset.pattern.permute.xlu0 0
    %567 = vperm.xlu0 %566, %v477
    %v568 = vpop.permute.xlu0 %567
    %571 = vset.pattern.permute.xlu0 0
    %572 = vperm.xlu0 %571, %v478
    %v573 = vpop.permute.xlu0 %572
    %576 = vset.pattern.permute.xlu0 0
    %577 = vperm.xlu0 %576, %v479
    %v578 = vpop.permute.xlu0 %577
    %581 = vset.pattern.permute.xlu0 0
    %582 = vperm.xlu0 %581, %v480
    %v583 = vpop.permute.xlu0 %582
    %586 = vset.pattern.permute.xlu0 0
    %587 = vperm.xlu0 %586, %v481
    %v588 = vpop.permute.xlu0 %587
    %591 = vset.pattern.permute.xlu0 0
    %592 = vperm.xlu0 %591, %v482
    %v593 = vpop.permute.xlu0 %592
    %v595 = vmul.f32 %v164, %v518
    %v596 = vmul.f32 %v167, %v523
    %v597 = vmul.f32 %v172, %v528
    %v598 = vmul.f32 %v175, %v533
    %v599 = vmul.f32 %v180, %v538
    %v600 = vmul.f32 %v183, %v543
    %v601 = vmul.f32 %v188, %v548
    %v602 = vmul.f32 %v191, %v553
    %v603 = vmul.f32 %v196, %v558
    %v604 = vmul.f32 %v199, %v563
    %v605 = vmul.f32 %v204, %v568
    %v606 = vmul.f32 %v207, %v573
    %v607 = vmul.f32 %v212, %v578
    %v608 = vmul.f32 %v215, %v583
    %v609 = vmul.f32 %v220, %v588
    %v610 = vmul.f32 %v223, %v593
    %612 = vset.pattern.permute.xlu0 0
    %613 = vperm.xlu0 %612, %v499
    %v614 = vpop.permute.xlu0 %613
    %617 = vset.pattern.permute.xlu0 0
    %618 = vperm.xlu0 %617, %v500
    %v619 = vpop.permute.xlu0 %618
    %622 = vset.pattern.permute.xlu0 0
    %623 = vperm.xlu0 %622, %v501
    %v624 = vpop.permute.xlu0 %623
    %627 = vset.pattern.permute.xlu0 0
    %628 = vperm.xlu0 %627, %v502
    %v629 = vpop.permute.xlu0 %628
    %632 = vset.pattern.permute.xlu0 0
    %633 = vperm.xlu0 %632, %v503
    %v634 = vpop.permute.xlu0 %633
    %637 = vset.pattern.permute.xlu0 0
    %638 = vperm.xlu0 %637, %v504
    %v639 = vpop.permute.xlu0 %638
    %642 = vset.pattern.permute.xlu0 0
    %643 = vperm.xlu0 %642, %v505
    %v644 = vpop.permute.xlu0 %643
    %647 = vset.pattern.permute.xlu0 0
    %648 = vperm.xlu0 %647, %v506
    %v649 = vpop.permute.xlu0 %648
    %652 = vset.pattern.permute.xlu0 0
    %653 = vperm.xlu0 %652, %v507
    %v654 = vpop.permute.xlu0 %653
    %657 = vset.pattern.permute.xlu0 0
    %658 = vperm.xlu0 %657, %v508
    %v659 = vpop.permute.xlu0 %658
    %662 = vset.pattern.permute.xlu0 0
    %663 = vperm.xlu0 %662, %v509
    %v664 = vpop.permute.xlu0 %663
    %667 = vset.pattern.permute.xlu0 0
    %668 = vperm.xlu0 %667, %v510
    %v669 = vpop.permute.xlu0 %668
    %672 = vset.pattern.permute.xlu0 0
    %673 = vperm.xlu0 %672, %v511
    %v674 = vpop.permute.xlu0 %673
    %677 = vset.pattern.permute.xlu0 0
    %678 = vperm.xlu0 %677, %v512
    %v679 = vpop.permute.xlu0 %678
    %682 = vset.pattern.permute.xlu0 0
    %683 = vperm.xlu0 %682, %v513
    %v684 = vpop.permute.xlu0 %683
    %687 = vset.pattern.permute.xlu0 0
    %688 = vperm.xlu0 %687, %v514
    %v689 = vpop.permute.xlu0 %688
    %v691 = vadd.f32 %v595, %v614
    %v692 = vadd.f32 %v596, %v619
    %v693 = vadd.f32 %v597, %v624
    %v694 = vadd.f32 %v598, %v629
    %v695 = vadd.f32 %v599, %v634
    %v696 = vadd.f32 %v600, %v639
    %v697 = vadd.f32 %v601, %v644
    %v698 = vadd.f32 %v602, %v649
    %v699 = vadd.f32 %v603, %v654
    %v700 = vadd.f32 %v604, %v659
    %v701 = vadd.f32 %v605, %v664
    %v702 = vadd.f32 %v606, %v669
    %v703 = vadd.f32 %v607, %v674
    %v704 = vadd.f32 %v608, %v679
    %v705 = vadd.f32 %v609, %v684
    %v706 = vadd.f32 %v610, %v689
    %v707 = vmax.f32 %v691, 0.0
    %v708 = vmax.f32 %v692, 0.0
    %v709 = vmax.f32 %v693, 0.0
    %v710 = vmax.f32 %v694, 0.0
    %v711 = vmax.f32 %v695, 0.0
    %v712 = vmax.f32 %v696, 0.0
    %v713 = vmax.f32 %v697, 0.0
    %v714 = vmax.f32 %v698, 0.0
    %v715 = vmax.f32 %v699, 0.0
    %v716 = vmax.f32 %v700, 0.0
    %v717 = vmax.f32 %v701, 0.0
    %v718 = vmax.f32 %v702, 0.0
    %v719 = vmax.f32 %v703, 0.0
    %v720 = vmax.f32 %v704, 0.0
    %v721 = vmax.f32 %v705, 0.0
    %v722 = vmax.f32 %v706, 0.0
    %v723 = vld [vmem:[%s4] sm:$0xf]
    %v724 = vld [vmem:[%s4 + $0x4] sm:$0xf]
    %v725 = vld [vmem:[%s4 + $0x8] sm:$0xf]
    %v726 = vld [vmem:[%s4 + $0xc] sm:$0xf]
    %v727 = vld [vmem:[%s4 + $0x10] sm:$0xf]
    %v728 = vld [vmem:[%s4 + $0x14] sm:$0xf]
    %v729 = vld [vmem:[%s4 + $0x18] sm:$0xf]
    %v730 = vld [vmem:[%s4 + $0x1c] sm:$0xf]
    %v731 = vpack.c.bf16 %v708, %v707
    %v732 = vpack.c.bf16 %v710, %v709
    %v733 = vpack.c.bf16 %v712, %v711
    %v734 = vpack.c.bf16 %v714, %v713
    %v735 = vpack.c.bf16 %v716, %v715
    %v736 = vpack.c.bf16 %v718, %v717
    %v737 = vpack.c.bf16 %v720, %v719
    %v738 = vpack.c.bf16 %v722, %v721
    %v747 = vunpack.c.l.b16 %v723
    %v748 = vunpack.c.l.b16 %v724
    %v749 = vunpack.c.l.b16 %v725
    %v750 = vunpack.c.l.b16 %v726
    %v751 = vunpack.c.l.b16 %v727
    %v752 = vunpack.c.l.b16 %v728
    %v753 = vunpack.c.l.b16 %v729
    %v754 = vunpack.c.l.b16 %v730
    %v755 = vpack.c.b16 %v748, %v747
    %v756 = vpack.c.b16 %v750, %v749
    %v757 = vpack.c.b16 %v752, %v751
    %v758 = vpack.c.b16 %v754, %v753
    %763 = vmatprep.subr.bf16.mxu0 0
    %764 = vmatpush1.bf16.msra.mxu0 %v731
    %765 = vmatprep.subr.bf16.mxu0 0
    %766 = vmatpush1.bf16.msra.mxu0 %v732
    %767 = vmatprep.subr.bf16.mxu0 0
    %768 = vmatpush1.bf16.msra.mxu0 %v733
    %769 = vmatprep.subr.bf16.mxu0 0
    %770 = vmatpush1.bf16.msra.mxu0 %v734
    %771 = vmatprep.subr.bf16.mxu0 0
    %772 = vmatpush1.bf16.msra.mxu0 %v735
    %773 = vmatprep.subr.bf16.mxu0 0
    %774 = vmatpush1.bf16.msra.mxu0 %v736
    %775 = vmatprep.subr.bf16.mxu0 0
    %776 = vmatpush1.bf16.msra.mxu0 %v737
    %777 = vmatprep.subr.bf16.mxu0 0
    %778 = vmatpush1.bf16.msra.mxu0 %v738
    %779 = vmatprep.subr.bf16.mxu0 0
    %780 = vmatpush1.bf16.msra.mxu0 0
    %781 = vmatprep.subr.bf16.mxu0 0
    %782 = vmatpush1.bf16.msra.mxu0 0
    %783 = vmatprep.subr.bf16.mxu0 0
    %784 = vmatpush1.bf16.msra.mxu0 0
    %785 = vmatprep.subr.bf16.mxu0 0
    %786 = vmatpush1.bf16.msra.mxu0 0
    %787 = vmatprep.subr.bf16.mxu0 0
    %788 = vmatpush1.bf16.msra.mxu0 0
    %789 = vmatprep.subr.bf16.mxu0 0
    %790 = vmatpush1.bf16.msra.mxu0 0
    %791 = vmatprep.subr.bf16.mxu0 0
    %792 = vmatpush1.bf16.msra.mxu0 0
    %793 = vmatprep.subr.bf16.mxu0 0
    %794 = vmatpush1.bf16.msra.mxu0 0
    %795 = vmatprep.mubr.bf16.mxu0 0
    %796 = vmatmul.mubr.bf16.gmra.mrb[0].mxu0 %v755
    %v797 = vpop.f32.mrb[0].mxu0
    %v798 = vadd.f32 0.0, %v797
    %v799 = vpop.f32.mrb[0].mxu0
    %v800 = vpop.f32.mrb[0].mxu0
    %v801 = vadd.f32 0.0, %v800
    %v802 = vpop.f32.mrb[0].mxu0
    %803 = vmatprep.mubr.bf16.mxu0 0
    %804 = vmatmul.mubr.bf16.gmra.mrb[0].mxu0 %v756
    %v805 = vpop.f32.mrb[0].mxu0
    %v806 = vadd.f32 0.0, %v805
    %v807 = vpop.f32.mrb[0].mxu0
    %v808 = vpop.f32.mrb[0].mxu0
    %v809 = vadd.f32 0.0, %v808
    %v810 = vpop.f32.mrb[0].mxu0
    %811 = vmatprep.mubr.bf16.mxu0 0
    %812 = vmatmul.mubr.bf16.gmra.mrb[0].mxu0 %v757
    %v813 = vpop.f32.mrb[0].mxu0
    %v814 = vadd.f32 0.0, %v813
    %v815 = vpop.f32.mrb[0].mxu0
    %v816 = vpop.f32.mrb[0].mxu0
    %v817 = vadd.f32 0.0, %v816
    %v818 = vpop.f32.mrb[0].mxu0
    %819 = vmatprep.mubr.bf16.mxu0 0
    %820 = vmatmul.mubr.bf16.gmra.mrb[0].mxu0 %v758
    %v821 = vpop.f32.mrb[0].mxu0
    %v822 = vadd.f32 0.0, %v821
    %v823 = vpop.f32.mrb[0].mxu0
    %v824 = vpop.f32.mrb[0].mxu0
    %v825 = vadd.f32 0.0, %v824
    %v826 = vpop.f32.mrb[0].mxu0
    %827 = vdwg.mxu0
    %v828 = vld [vmem:[%s5] sm:$0xff]
    %v829 = vld [vmem:[%s5 + $0x8] sm:$0xff]
    %v830 = vld [vmem:[%s5 + $0x10] sm:$0xff]
    %v831 = vld [vmem:[%s5 + $0x18] sm:$0xff]
    %v832 = vld [vmem:[%s5 + $0x20] sm:$0xff]
    %v833 = vld [vmem:[%s5 + $0x28] sm:$0xff]
    %v834 = vld [vmem:[%s5 + $0x30] sm:$0xff]
    %v835 = vld [vmem:[%s5 + $0x38] sm:$0xff]
    %v836 = vld [vmem:[%s6] sm:$0xff]
    %v837 = vld [vmem:[%s6 + $0x8] sm:$0xff]
    %v838 = vld [vmem:[%s6 + $0x10] sm:$0xff]
    %v839 = vld [vmem:[%s6 + $0x18] sm:$0xff]
    %v840 = vld [vmem:[%s6 + $0x20] sm:$0xff]
    %v841 = vld [vmem:[%s6 + $0x28] sm:$0xff]
    %v842 = vld [vmem:[%s6 + $0x30] sm:$0xff]
    %v843 = vld [vmem:[%s6 + $0x38] sm:$0xff]
    %v844 = vsel %vm258, %v798, 0.0
    %845 = vadd.xlane.f32.xlu0 %v844
    %v846 = vpop.xlane.xlu0 %845
    %v847 = vsel %vm258, %v801, 0.0
    %848 = vadd.xlane.f32.xlu0 %v847
    %v849 = vpop.xlane.xlu0 %848
    %v850 = vsel %vm258, %v806, 0.0
    %851 = vadd.xlane.f32.xlu0 %v850
    %v852 = vpop.xlane.xlu0 %851
    %v853 = vsel %vm258, %v809, 0.0
    %854 = vadd.xlane.f32.xlu0 %v853
    %v855 = vpop.xlane.xlu0 %854
    %v856 = vsel %vm258, %v814, 0.0
    %857 = vadd.xlane.f32.xlu0 %v856
    %v858 = vpop.xlane.xlu0 %857
    %v859 = vsel %vm258, %v817, 0.0
    %860 = vadd.xlane.f32.xlu0 %v859
    %v861 = vpop.xlane.xlu0 %860
    %v862 = vsel %vm258, %v822, 0.0
    %863 = vadd.xlane.f32.xlu0 %v862
    %v864 = vpop.xlane.xlu0 %863
    %v865 = vsel %vm258, %v825, 0.0
    %866 = vadd.xlane.f32.xlu0 %v865
    %v867 = vpop.xlane.xlu0 %866
    %v868 = vmul.f32 %v846, 0.125
    %v869 = vmul.f32 %v849, 0.125
    %v870 = vmul.f32 %v852, 0.125
    %v871 = vmul.f32 %v855, 0.125
    %v872 = vmul.f32 %v858, 0.125
    %v873 = vmul.f32 %v861, 0.125
    %v874 = vmul.f32 %v864, 0.125
    %v875 = vmul.f32 %v867, 0.125
    %v876 = vmul.f32 %v798, %v798
    %v877 = vmul.f32 %v801, %v801
    %v878 = vmul.f32 %v806, %v806
    %v879 = vmul.f32 %v809, %v809
    %v880 = vmul.f32 %v814, %v814
    %v881 = vmul.f32 %v817, %v817
    %v882 = vmul.f32 %v822, %v822
    %v883 = vmul.f32 %v825, %v825
    %v884 = vsel %vm258, %v876, 0.0
    %885 = vadd.xlane.f32.xlu0 %v884
    %v886 = vpop.xlane.xlu0 %885
    %v887 = vsel %vm258, %v877, 0.0
    %888 = vadd.xlane.f32.xlu0 %v887
    %v889 = vpop.xlane.xlu0 %888
    %v890 = vsel %vm258, %v878, 0.0
    %891 = vadd.xlane.f32.xlu0 %v890
    %v892 = vpop.xlane.xlu0 %891
    %v893 = vsel %vm258, %v879, 0.0
    %894 = vadd.xlane.f32.xlu0 %v893
    %v895 = vpop.xlane.xlu0 %894
    %v896 = vsel %vm258, %v880, 0.0
    %897 = vadd.xlane.f32.xlu0 %v896
    %v898 = vpop.xlane.xlu0 %897
    %v899 = vsel %vm258, %v881, 0.0
    %900 = vadd.xlane.f32.xlu0 %v899
    %v901 = vpop.xlane.xlu0 %900
    %v902 = vsel %vm258, %v882, 0.0
    %903 = vadd.xlane.f32.xlu0 %v902
    %v904 = vpop.xlane.xlu0 %903
    %v905 = vsel %vm258, %v883, 0.0
    %906 = vadd.xlane.f32.xlu0 %v905
    %v907 = vpop.xlane.xlu0 %906
    %v908 = vmul.f32 %v886, 0.125
    %v909 = vmul.f32 %v889, 0.125
    %v910 = vmul.f32 %v892, 0.125
    %v911 = vmul.f32 %v895, 0.125
    %v912 = vmul.f32 %v898, 0.125
    %v913 = vmul.f32 %v901, 0.125
    %v914 = vmul.f32 %v904, 0.125
    %v915 = vmul.f32 %v907, 0.125
    %v916 = vmul.f32 %v868, %v868
    %v917 = vmul.f32 %v869, %v869
    %v918 = vmul.f32 %v870, %v870
    %v919 = vmul.f32 %v871, %v871
    %v920 = vmul.f32 %v872, %v872
    %v921 = vmul.f32 %v873, %v873
    %v922 = vmul.f32 %v874, %v874
    %v923 = vmul.f32 %v875, %v875
    %v924 = vsub.f32 %v908, %v916
    %v925 = vsub.f32 %v909, %v917
    %v926 = vsub.f32 %v910, %v918
    %v927 = vsub.f32 %v911, %v919
    %v928 = vsub.f32 %v912, %v920
    %v929 = vsub.f32 %v913, %v921
    %v930 = vsub.f32 %v914, %v922
    %v931 = vsub.f32 %v915, %v923
    %v932 = vadd.f32 %v924, 1e-05
    %v933 = vadd.f32 %v925, 1e-05
    %v934 = vadd.f32 %v926, 1e-05
    %v935 = vadd.f32 %v927, 1e-05
    %v936 = vadd.f32 %v928, 1e-05
    %v937 = vadd.f32 %v929, 1e-05
    %v938 = vadd.f32 %v930, 1e-05
    %v939 = vadd.f32 %v931, 1e-05
    %v940 = vrsqrt.pop %v932
    %v941 = vrsqrt.pop %v933
    %v942 = vrsqrt.pop %v934
    %v943 = vrsqrt.pop %v935
    %v944 = vrsqrt.pop %v936
    %v945 = vrsqrt.pop %v937
    %v946 = vrsqrt.pop %v938
    %v947 = vrsqrt.pop %v939
    %v948 = vmul.f32 %v828, %v940
    %v949 = vmul.f32 %v829, %v941
    %v950 = vmul.f32 %v830, %v942
    %v951 = vmul.f32 %v831, %v943
    %v952 = vmul.f32 %v832, %v944
    %v953 = vmul.f32 %v833, %v945
    %v954 = vmul.f32 %v834, %v946
    %v955 = vmul.f32 %v835, %v947
    %v956 = vmul.f32 %v868, %v948
    %v957 = vmul.f32 %v869, %v949
    %v958 = vmul.f32 %v870, %v950
    %v959 = vmul.f32 %v871, %v951
    %v960 = vmul.f32 %v872, %v952
    %v961 = vmul.f32 %v873, %v953
    %v962 = vmul.f32 %v874, %v954
    %v963 = vmul.f32 %v875, %v955
    %v964 = vsub.f32 %v836, %v956
    %v965 = vsub.f32 %v837, %v957
    %v966 = vsub.f32 %v838, %v958
    %v967 = vsub.f32 %v839, %v959
    %v968 = vsub.f32 %v840, %v960
    %v969 = vsub.f32 %v841, %v961
    %v970 = vsub.f32 %v842, %v962
    %v971 = vsub.f32 %v843, %v963
    %973 = vset.pattern.permute.xlu0 0
    %974 = vperm.xlu0 %973, %v948
    %v975 = vpop.permute.xlu0 %974
    %978 = vset.pattern.permute.xlu0 0
    %979 = vperm.xlu0 %978, %v949
    %v980 = vpop.permute.xlu0 %979
    %983 = vset.pattern.permute.xlu0 0
    %984 = vperm.xlu0 %983, %v950
    %v985 = vpop.permute.xlu0 %984
    %988 = vset.pattern.permute.xlu0 0
    %989 = vperm.xlu0 %988, %v951
    %v990 = vpop.permute.xlu0 %989
    %993 = vset.pattern.permute.xlu0 0
    %994 = vperm.xlu0 %993, %v952
    %v995 = vpop.permute.xlu0 %994
    %998 = vset.pattern.permute.xlu0 0
    %999 = vperm.xlu0 %998, %v953
    %v1000 = vpop.permute.xlu0 %999
    %1003 = vset.pattern.permute.xlu0 0
    %1004 = vperm.xlu0 %1003, %v954
    %v1005 = vpop.permute.xlu0 %1004
    %1008 = vset.pattern.permute.xlu0 0
    %1009 = vperm.xlu0 %1008, %v955
    %v1010 = vpop.permute.xlu0 %1009
    %v1012 = vmul.f32 %v798, %v975
    %v1013 = vmul.f32 %v801, %v980
    %v1014 = vmul.f32 %v806, %v985
    %v1015 = vmul.f32 %v809, %v990
    %v1016 = vmul.f32 %v814, %v995
    %v1017 = vmul.f32 %v817, %v1000
    %v1018 = vmul.f32 %v822, %v1005
    %v1019 = vmul.f32 %v825, %v1010
    %1021 = vset.pattern.permute.xlu0 0
    %1022 = vperm.xlu0 %1021, %v964
    %v1023 = vpop.permute.xlu0 %1022
    %1026 = vset.pattern.permute.xlu0 0
    %1027 = vperm.xlu0 %1026, %v965
    %v1028 = vpop.permute.xlu0 %1027
    %1031 = vset.pattern.permute.xlu0 0
    %1032 = vperm.xlu0 %1031, %v966
    %v1033 = vpop.permute.xlu0 %1032
    %1036 = vset.pattern.permute.xlu0 0
    %1037 = vperm.xlu0 %1036, %v967
    %v1038 = vpop.permute.xlu0 %1037
    %1041 = vset.pattern.permute.xlu0 0
    %1042 = vperm.xlu0 %1041, %v968
    %v1043 = vpop.permute.xlu0 %1042
    %1046 = vset.pattern.permute.xlu0 0
    %1047 = vperm.xlu0 %1046, %v969
    %v1048 = vpop.permute.xlu0 %1047
    %1051 = vset.pattern.permute.xlu0 0
    %1052 = vperm.xlu0 %1051, %v970
    %v1053 = vpop.permute.xlu0 %1052
    %1056 = vset.pattern.permute.xlu0 0
    %1057 = vperm.xlu0 %1056, %v971
    %v1058 = vpop.permute.xlu0 %1057
    %v1060 = vadd.f32 %v1012, %v1023
    %v1061 = vadd.f32 %v1013, %v1028
    %v1062 = vadd.f32 %v1014, %v1033
    %v1063 = vadd.f32 %v1015, %v1038
    %v1064 = vadd.f32 %v1016, %v1043
    %v1065 = vadd.f32 %v1017, %v1048
    %v1066 = vadd.f32 %v1018, %v1053
    %v1067 = vadd.f32 %v1019, %v1058
    %v1068 = vmax.f32 %v1060, 0.0
    %v1069 = vmax.f32 %v1061, 0.0
    %v1070 = vmax.f32 %v1062, 0.0
    %v1071 = vmax.f32 %v1063, 0.0
    %v1072 = vmax.f32 %v1064, 0.0
    %v1073 = vmax.f32 %v1065, 0.0
    %v1074 = vmax.f32 %v1066, 0.0
    %v1075 = vmax.f32 %v1067, 0.0
    %v1076 = vld [vmem:[%s7] sm:$0xf]
    %v1077 = vld [vmem:[%s7 + $0x4] sm:$0xf]
    %v1078 = vld [vmem:[%s7 + $0x8] sm:$0xf]
    %v1079 = vld [vmem:[%s7 + $0xc] sm:$0xf]
    %v1080 = vpack.c.bf16 %v1069, %v1068
    %v1081 = vpack.c.bf16 %v1071, %v1070
    %v1082 = vpack.c.bf16 %v1073, %v1072
    %v1083 = vpack.c.bf16 %v1075, %v1074
    %v1088 = vunpack.c.l.b16 %v1076
    %v1089 = vunpack.c.l.b16 %v1077
    %v1090 = vunpack.c.l.b16 %v1078
    %v1091 = vunpack.c.l.b16 %v1079
    %v1092 = vpack.c.b16 %v1089, %v1088
    %v1093 = vpack.c.b16 %v1091, %v1090
    %vm1094 = vcmask 523264
    %v1096 = vsel %vm1094, %v1092, 0
    %v1099 = vsel %vm1094, %v1093, 0
    %1101 = vmatprep.subr.bf16.mxu0 0
    %1102 = vmatpush1.bf16.msra.mxu0 %v1080
    %1103 = vmatprep.subr.bf16.mxu0 0
    %1104 = vmatpush1.bf16.msra.mxu0 %v1081
    %1105 = vmatprep.subr.bf16.mxu0 0
    %1106 = vmatpush1.bf16.msra.mxu0 %v1082
    %1107 = vmatprep.subr.bf16.mxu0 0
    %1108 = vmatpush1.bf16.msra.mxu0 %v1083
    %1109 = vmatprep.subr.bf16.mxu0 0
    %1110 = vmatpush1.bf16.msra.mxu0 0
    %1111 = vmatprep.subr.bf16.mxu0 0
    %1112 = vmatpush1.bf16.msra.mxu0 0
    %1113 = vmatprep.subr.bf16.mxu0 0
    %1114 = vmatpush1.bf16.msra.mxu0 0
    %1115 = vmatprep.subr.bf16.mxu0 0
    %1116 = vmatpush1.bf16.msra.mxu0 0
    %1117 = vmatprep.subr.bf16.mxu0 0
    %1118 = vmatpush1.bf16.msra.mxu0 0
    %1119 = vmatprep.subr.bf16.mxu0 0
    %1120 = vmatpush1.bf16.msra.mxu0 0
    %1121 = vmatprep.subr.bf16.mxu0 0
    %1122 = vmatpush1.bf16.msra.mxu0 0
    %1123 = vmatprep.subr.bf16.mxu0 0
    %1124 = vmatpush1.bf16.msra.mxu0 0
    %1125 = vmatprep.subr.bf16.mxu0 0
    %1126 = vmatpush1.bf16.msra.mxu0 0
    %1127 = vmatprep.subr.bf16.mxu0 0
    %1128 = vmatpush1.bf16.msra.mxu0 0
    %1129 = vmatprep.subr.bf16.mxu0 0
    %1130 = vmatpush1.bf16.msra.mxu0 0
    %1131 = vmatprep.subr.bf16.mxu0 0
    %1132 = vmatpush1.bf16.msra.mxu0 0
    %1133 = vmatprep.mubr.bf16.mxu0 0
    %1134 = vmatmul.mubr.bf16.gmra.mrb[0].mxu0 %v1096
    %v1135 = vpop.f32.mrb[0].mxu0
    %v1136 = vadd.f32 0.0, %v1135
    %v1137 = vpop.f32.mrb[0].mxu0
    %v1138 = vpop.f32.mrb[0].mxu0
    %v1139 = vadd.f32 0.0, %v1138
    %v1140 = vpop.f32.mrb[0].mxu0
    %1141 = vmatprep.mubr.bf16.mxu0 0
    %1142 = vmatmul.mubr.bf16.gmra.mrb[0].mxu0 %v1099
    %v1143 = vpop.f32.mrb[0].mxu0
    %v1144 = vadd.f32 0.0, %v1143
    %v1145 = vpop.f32.mrb[0].mxu0
    %v1146 = vpop.f32.mrb[0].mxu0
    %v1147 = vadd.f32 0.0, %v1146
    %v1148 = vpop.f32.mrb[0].mxu0
    %1149 = vdwg.mxu0
    %v1150 = vld [vmem:[%s8] sm:$0xff]
    %v1151 = vld [vmem:[%s8 + $0x8] sm:$0xff]
    %v1152 = vld [vmem:[%s8 + $0x10] sm:$0xff]
    %v1153 = vld [vmem:[%s8 + $0x18] sm:$0xff]
    %v1154 = vld [vmem:[%s9] sm:$0xff]
    %v1155 = vld [vmem:[%s9 + $0x8] sm:$0xff]
    %v1156 = vld [vmem:[%s9 + $0x10] sm:$0xff]
    %v1157 = vld [vmem:[%s9 + $0x18] sm:$0xff]
    %v1158 = vsel %vm258, %v1136, 0.0
    %1159 = vadd.xlane.f32.xlu0 %v1158
    %v1160 = vpop.xlane.xlu0 %1159
    %v1161 = vsel %vm258, %v1139, 0.0
    %1162 = vadd.xlane.f32.xlu0 %v1161
    %v1163 = vpop.xlane.xlu0 %1162
    %v1164 = vsel %vm258, %v1144, 0.0
    %1165 = vadd.xlane.f32.xlu0 %v1164
    %v1166 = vpop.xlane.xlu0 %1165
    %v1167 = vsel %vm258, %v1147, 0.0
    %1168 = vadd.xlane.f32.xlu0 %v1167
    %v1169 = vpop.xlane.xlu0 %1168
    %v1170 = vmul.f32 %v1160, 0.125
    %v1171 = vmul.f32 %v1163, 0.125
    %v1172 = vmul.f32 %v1166, 0.125
    %v1173 = vmul.f32 %v1169, 0.125
    %v1174 = vmul.f32 %v1136, %v1136
    %v1175 = vmul.f32 %v1139, %v1139
    %v1176 = vmul.f32 %v1144, %v1144
    %v1177 = vmul.f32 %v1147, %v1147
    %v1178 = vsel %vm258, %v1174, 0.0
    %1179 = vadd.xlane.f32.xlu0 %v1178
    %v1180 = vpop.xlane.xlu0 %1179
    %v1181 = vsel %vm258, %v1175, 0.0
    %1182 = vadd.xlane.f32.xlu0 %v1181
    %v1183 = vpop.xlane.xlu0 %1182
    %v1184 = vsel %vm258, %v1176, 0.0
    %1185 = vadd.xlane.f32.xlu0 %v1184
    %v1186 = vpop.xlane.xlu0 %1185
    %v1187 = vsel %vm258, %v1177, 0.0
    %1188 = vadd.xlane.f32.xlu0 %v1187
    %v1189 = vpop.xlane.xlu0 %1188
    %v1190 = vmul.f32 %v1180, 0.125
    %v1191 = vmul.f32 %v1183, 0.125
    %v1192 = vmul.f32 %v1186, 0.125
    %v1193 = vmul.f32 %v1189, 0.125
    %v1194 = vmul.f32 %v1170, %v1170
    %v1195 = vmul.f32 %v1171, %v1171
    %v1196 = vmul.f32 %v1172, %v1172
    %v1197 = vmul.f32 %v1173, %v1173
    %v1198 = vsub.f32 %v1190, %v1194
    %v1199 = vsub.f32 %v1191, %v1195
    %v1200 = vsub.f32 %v1192, %v1196
    %v1201 = vsub.f32 %v1193, %v1197
    %v1202 = vadd.f32 %v1198, 1e-05
    %v1203 = vadd.f32 %v1199, 1e-05
    %v1204 = vadd.f32 %v1200, 1e-05
    %v1205 = vadd.f32 %v1201, 1e-05
    %v1206 = vrsqrt.pop %v1202
    %v1207 = vrsqrt.pop %v1203
    %v1208 = vrsqrt.pop %v1204
    %v1209 = vrsqrt.pop %v1205
    %v1210 = vmul.f32 %v1150, %v1206
    %v1211 = vmul.f32 %v1151, %v1207
    %v1212 = vmul.f32 %v1152, %v1208
    %v1213 = vmul.f32 %v1153, %v1209
    %v1214 = vmul.f32 %v1170, %v1210
    %v1215 = vmul.f32 %v1171, %v1211
    %v1216 = vmul.f32 %v1172, %v1212
    %v1217 = vmul.f32 %v1173, %v1213
    %v1218 = vsub.f32 %v1154, %v1214
    %v1219 = vsub.f32 %v1155, %v1215
    %v1220 = vsub.f32 %v1156, %v1216
    %v1221 = vsub.f32 %v1157, %v1217
    %1223 = vset.pattern.permute.xlu0 0
    %1224 = vperm.xlu0 %1223, %v1210
    %v1225 = vpop.permute.xlu0 %1224
    %1228 = vset.pattern.permute.xlu0 0
    %1229 = vperm.xlu0 %1228, %v1211
    %v1230 = vpop.permute.xlu0 %1229
    %1233 = vset.pattern.permute.xlu0 0
    %1234 = vperm.xlu0 %1233, %v1212
    %v1235 = vpop.permute.xlu0 %1234
    %1238 = vset.pattern.permute.xlu0 0
    %1239 = vperm.xlu0 %1238, %v1213
    %v1240 = vpop.permute.xlu0 %1239
    %v1242 = vmul.f32 %v1136, %v1225
    %v1243 = vmul.f32 %v1139, %v1230
    %v1244 = vmul.f32 %v1144, %v1235
    %v1245 = vmul.f32 %v1147, %v1240
    %1247 = vset.pattern.permute.xlu0 0
    %1248 = vperm.xlu0 %1247, %v1218
    %v1249 = vpop.permute.xlu0 %1248
    %1252 = vset.pattern.permute.xlu0 0
    %1253 = vperm.xlu0 %1252, %v1219
    %v1254 = vpop.permute.xlu0 %1253
    %1257 = vset.pattern.permute.xlu0 0
    %1258 = vperm.xlu0 %1257, %v1220
    %v1259 = vpop.permute.xlu0 %1258
    %1262 = vset.pattern.permute.xlu0 0
    %1263 = vperm.xlu0 %1262, %v1221
    %v1264 = vpop.permute.xlu0 %1263
    %v1266 = vadd.f32 %v1242, %v1249
    %v1267 = vadd.f32 %v1243, %v1254
    %v1268 = vadd.f32 %v1244, %v1259
    %v1269 = vadd.f32 %v1245, %v1264
    %v1270 = vmax.f32 %v1266, 0.0
    %v1271 = vmax.f32 %v1267, 0.0
    %v1272 = vmax.f32 %v1268, 0.0
    %v1273 = vmax.f32 %v1269, 0.0
    %v1274 = vld [vmem:[%s10] sm:$0xff]
    %v1275 = vld [vmem:[%s10 + $0x8] sm:$0xff]
    %v1276 = vld [vmem:[%s10 + $0x10] sm:$0xff]
    %v1277 = vld [vmem:[%s10 + $0x18] sm:$0xff]
    %1279 = vset.pattern.permute.xlu0 0
    %1280 = vperm.xlu0 %1279, %v1274
    %v1281 = vpop.permute.xlu0 %1280
    %1284 = vset.pattern.permute.xlu0 0
    %1285 = vperm.xlu0 %1284, %v1275
    %v1286 = vpop.permute.xlu0 %1285
    %1289 = vset.pattern.permute.xlu0 0
    %1290 = vperm.xlu0 %1289, %v1276
    %v1291 = vpop.permute.xlu0 %1290
    %1294 = vset.pattern.permute.xlu0 0
    %1295 = vperm.xlu0 %1294, %v1277
    %v1296 = vpop.permute.xlu0 %1295
    %v1298 = vmul.f32 %v1270, %v1281
    %v1299 = vmul.f32 %v1271, %v1286
    %v1300 = vmul.f32 %v1272, %v1291
    %v1301 = vmul.f32 %v1273, %v1296
    %v1302 = vsel %vm258, %v1298, 0.0
    %v1303 = vsel %vm258, %v1299, 0.0
    %v1304 = vadd.f32 %v1302, %v1303
    %v1305 = vsel %vm258, %v1300, 0.0
    %v1306 = vadd.f32 %v1304, %v1305
    %v1307 = vsel %vm258, %v1301, 0.0
    %v1308 = vadd.f32 %v1306, %v1307
    %v1309 = vrot.slane %v1308, 4
    %v1310 = vadd.f32 %v1308, %v1309
    %v1311 = vrot.slane %v1310, 2
    %v1312 = vadd.f32 %v1310, %v1311
    %v1313 = vrot.slane %v1312, 1
    %v1314 = vadd.f32 %v1312, %v1313
    %v1315 = vld [vmem:[#allocation2] sm:$0x1]
    %1317 = vset.pattern.permute.xlu0 0
    %1318 = vperm.xlu0 %1317, %v1315
    %v1319 = vpop.permute.xlu0 %1318
    %v1321 = vlaneseq
    %v1322 = vshrl.u32 %v1321, 7
    %v1323 = vsub.s32 0, %v1322
    %v1324 = vrot.slane %v1319, %v1323
    %v1325 = vadd.f32 %v1314, %v1324
    %vm1326 = vcmask 57344
    %1327 = vst.msk [vmem:[#allocation3] sm:$0x1] %vm1326, %v1325
    // Predicated region
    $region50: #{tpu_custom_call.1} parent=1 // pred_check
      _
    $region51: #{tpu_custom_call.1} parent=1 // pred_check_branch
      %1329 = sbr.rel (0) target = $region53
    $region52: #{tpu_custom_call.1} parent=1 // pred_region
      %s1331 = ssub.s32 16, 16
      %1332 = vsyncadd [#allocation4], %s1331
      %s1334 = sshll.u32 [#allocation3], 4
      %s1335 = int_to_ptr.vmem [resolvable:$true] %s1334
      %1337 = dma.vmem_to_hbm [thread:$0]  %s1335, 16, %s12, [#allocation4]
    $region53: #{tpu_custom_call.1} parent=1 // pred_fallthru
      _
    // Predicated region
    $region54: #{tpu_custom_call.1} parent=1 // pred_check
      _
    $region55: #{tpu_custom_call.1} parent=1 // pred_check_branch
      %1339 = sbr.rel (0) target = $region57
    $region56: #{tpu_custom_call.1} parent=1 // pred_region
      %1340 = dma.done [#allocation4], 16
    $region57: #{tpu_custom_call.1} parent=1 // pred_fallthru
      _
    %1341 = vsyncpa [#allocation4], 1

</llo_original>
